<compile_context>
chip_gen: v6e
topology: v6e:2x2x1
jax: 0.10.0
libtpu: 0.0.40
codegen_flags: <defaults>
</compile_context>

<pallas_src>
import jax
import jax.numpy as jnp
from jax.experimental import pallas as pl
from jax.experimental.pallas import tpu as pltpu


def _round_up(n, m):
    return ((n + m - 1) // m) * m


def _ae_kernel(x_ref,
               w1_ref, b1_ref,
               w2_ref, b2_ref,
               w3_ref, b3_ref,
               w4_ref, b4_ref,
               o_ref):
    """Fused forward pass for one batch tile.

    encoder: Linear(128,64) -> ReLU -> Linear(64,32) -> ReLU
    decoder: Linear(32,64)  -> ReLU -> Linear(64,128) -> Sigmoid

    MXU operand dtype == weight dtype (f32 on the f32 path, bf16 on the bf16
    path); accumulation / bias add / ReLU / sigmoid always run in f32.
    """
    cd = w1_ref.dtype                      # MXU operand dtype (f32 or bf16)
    x = x_ref[...].astype(cd)

    # Encoder
    h = jnp.dot(x, w1_ref[...], preferred_element_type=jnp.float32) + b1_ref[...]
    h = jnp.maximum(h, 0.0).astype(cd)
    h = jnp.dot(h, w2_ref[...], preferred_element_type=jnp.float32) + b2_ref[...]
    h = jnp.maximum(h, 0.0).astype(cd)

    # Decoder
    h = jnp.dot(h, w3_ref[...], preferred_element_type=jnp.float32) + b3_ref[...]
    h = jnp.maximum(h, 0.0).astype(cd)
    z = jnp.dot(h, w4_ref[...], preferred_element_type=jnp.float32) + b4_ref[...]

    # Single cast to the I/O dtype at the final store.
    o_ref[...] = jax.nn.sigmoid(z).astype(o_ref.dtype)


def ae_linear_forward(x, params, *, block_b=4096):
    """Run the fused autoencoder kernel.

    x: [B, 128], float32 or bfloat16.  bf16 I/O is the fast path (halves HBM
       traffic and feeds single-pass bf16 operands to the MXU).
    params: dict with w1[128,64], b1[1,64], w2[64,32], b2[1,32],
                      w3[32,64],  b3[1,64], w4[64,128], b4[1,128] (float32).
    """
    B, D_in = x.shape
    assert D_in == 128
    out_dtype = x.dtype
    is_bf16 = x.dtype == jnp.bfloat16

    # MXU operand dtype.  Accumulation stays f32 inside the kernel either way;
    # biases are always kept in f32.
    compute_dtype = jnp.bfloat16 if is_bf16 else jnp.float32
    w = [params[f"w{i}"].astype(compute_dtype) for i in (1, 2, 3, 4)]
    b = [params[f"b{i}"].astype(jnp.float32) for i in (1, 2, 3, 4)]

    # ---- batch tile selection ----------------------------------------------
    # Sublane packing: 8 rows per vreg for f32, 16 for bf16.
    min_rows = 16 if is_bf16 else 8
    bb = _round_up(min(block_b, _round_up(B, min_rows)), min_rows)
    # Guarantee >= 2 grid steps when the batch allows it, so v7x's two
    # TensorCores can both work on the "parallel" batch axis.
    if pl.cdiv(B, bb) < 2 and B >= 2 * min_rows:
        bb = _round_up(pl.cdiv(B, 2), min_rows)
    grid = (pl.cdiv(B, bb),)
    # No jnp.pad / output slice: any trailing partial block is handled by the
    # pipeline's padded reads + clipped writeback (garbage rows only pass
    # through dot/ReLU/sigmoid, which is safe, and are never written back).

    # ---- VMEM budget / cost hint ---------------------------------------------
    itemsize = x.dtype.itemsize
    param_bytes = int(sum(int(a.size) * a.dtype.itemsize for a in (*w, *b)))
    tile_bytes = bb * 128 * itemsize
    # 2x (in + out tile) for double buffering, params budgeted x2 for safety,
    # plus margin for compiler-internal scratch.  Clamp to [16 MiB, 64 MiB]
    # (>= every generation's default, <= v7x physical VMEM per core).
    footprint = 2 * 2 * tile_bytes + 2 * param_bytes + (4 << 20)
    vmem_limit = int(max(16 << 20, min(64 << 20, footprint)))

    cost = pl.CostEstimate(
        flops=2 * B * (128 * 64 + 64 * 32 + 32 * 64 + 64 * 128),
        transcendentals=B * 128,                         # sigmoid
        bytes_accessed=2 * B * 128 * itemsize + param_bytes,
    )

    # Weights/biases: full-array block with a constant block index -> resident
    # in VMEM across all grid steps (the pipeline skips re-copies when the block
    # index does not change).
    full = lambda arr: pl.BlockSpec(arr.shape, lambda i: (0, 0))

    out = pl.pallas_call(
        _ae_kernel,
        out_shape=jax.ShapeDtypeStruct((B, 128), out_dtype),
        grid_spec=pltpu.PrefetchScalarGridSpec(
            num_scalar_prefetch=0,
            grid=grid,
            in_specs=[
                pl.BlockSpec((bb, 128), lambda i: (i, 0)),      # x tile
                full(w[0]), full(b[0]),
                full(w[1]), full(b[1]),
                full(w[2]), full(b[2]),
                full(w[3]), full(b[3]),
            ],
            out_specs=pl.BlockSpec((bb, 128), lambda i: (i, 0)),
        ),
        compiler_params=pltpu.CompilerParams(
            dimension_semantics=("parallel",),
            vmem_limit_bytes=vmem_limit,
        ),
        cost_estimate=cost,
    )(x, w[0], b[0], w[1], b[1], w[2], b[2], w[3], b[3])

    return out


def init_params(key):
    """Deterministic PyTorch-style (Kaiming-uniform-ish) init for the 4 Linears."""
    dims = [(128, 64), (64, 32), (32, 64), (64, 128)]
    params = {}
    for idx, (fan_in, fan_out) in enumerate(dims, start=1):
        key, kw, kb = jax.random.split(key, 3)
        bound = 1.0 / jnp.sqrt(jnp.float32(fan_in))
        # Stored as [in, out] so the kernel computes x @ W.
        params[f"w{idx}"] = jax.random.uniform(
            kw, (fan_in, fan_out), jnp.float32, -bound, bound)
        params[f"b{idx}"] = jax.random.uniform(
            kb, (1, fan_out), jnp.float32, -bound, bound)
    return params


def ae_linear_reference(x, params):
    """Plain-JAX f32 reference for correctness checks."""
    x = x.astype(jnp.float32)
    h = jnp.maximum(x @ params["w1"] + params["b1"], 0.0)
    h = jnp.maximum(h @ params["w2"] + params["b2"], 0.0)
    h = jnp.maximum(h @ params["w3"] + params["b3"], 0.0)
    return jax.nn.sigmoid(h @ params["w4"] + params["b4"])


if __name__ == "__main__":
    key = jax.random.PRNGKey(0)
    kx, kp = jax.random.split(key)
    params = init_params(kp)

    # ---- f32 path, multi-step grid (48 rows -> two 24-row "parallel" tiles) ----
    B = 48
    x = jax.random.normal(kx, (B, 128), jnp.float32)
    out = jax.block_until_ready(ae_linear_forward(x, params))
    ref = ae_linear_reference(x, params)
    assert out.shape == (B, 128)
    assert jnp.allclose(out, ref, atol=1e-5, rtol=1e-5), "f32 mismatch vs reference"

    # ---- f32 path, ragged tiny batch (5 rows in one 8-row block; no jnp.pad) ----
    B1 = 5
    x1 = jax.random.normal(jax.random.fold_in(kx, 1), (B1, 128), jnp.float32)
    out1 = jax.block_until_ready(ae_linear_forward(x1, params))
    ref1 = ae_linear_reference(x1, params)
    assert out1.shape == (B1, 128)
    assert jnp.allclose(out1, ref1, atol=1e-5, rtol=1e-5), "ragged f32 mismatch"

    # ---- bf16 I/O fast path, ragged (24 rows in one 32-row bf16 block) ----
    B2 = 24
    x2 = jax.random.normal(jax.random.fold_in(kx, 2),
                           (B2, 128), jnp.float32).astype(jnp.bfloat16)
    out2 = jax.block_until_ready(ae_linear_forward(x2, params))
    ref2 = ae_linear_reference(x2, params)   # f32 reference from bf16-rounded input
    assert out2.shape == (B2, 128)
    assert out2.dtype == jnp.bfloat16
    assert jnp.allclose(out2.astype(jnp.float32), ref2, atol=3e-2), \
        "bf16 mismatch vs reference"

    print("KERNEL_OK")
</pallas_src>

<mosaic_0001>
module attributes {stable_mosaic.version = 11 : i64} {
  func.func @_ae_kernel(%arg0: i32, %arg1: memref<24x128xf32, #tpu.memory_space<vmem>>, %arg2: memref<128x64xf32, #tpu.memory_space<vmem>>, %arg3: memref<1x64xf32, #tpu.memory_space<vmem>>, %arg4: memref<64x32xf32, #tpu.memory_space<vmem>>, %arg5: memref<1x32xf32, #tpu.memory_space<vmem>>, %arg6: memref<32x64xf32, #tpu.memory_space<vmem>>, %arg7: memref<1x64xf32, #tpu.memory_space<vmem>>, %arg8: memref<64x128xf32, #tpu.memory_space<vmem>>, %arg9: memref<1x128xf32, #tpu.memory_space<vmem>>, %arg10: memref<24x128xf32, #tpu.memory_space<vmem>>) attributes {dimension_semantics = [#tpu.dimension_semantics<parallel>], iteration_bounds = array<i64: 2>, scalar_prefetch = 0 : i64, scratch_operands = 0 : i64, tpu.core_type = #tpu.core_type<tc>, window_params = [{transform_indices = @transform_0, window_bounds = array<i64: 24, 128>}, {pipeline_mode = #tpu.pipeline_mode<synchronous>, transform_indices = @transform_1, window_bounds = array<i64: 128, 64>}, {pipeline_mode = #tpu.pipeline_mode<synchronous>, transform_indices = @transform_2, window_bounds = array<i64: 1, 64>}, {pipeline_mode = #tpu.pipeline_mode<synchronous>, transform_indices = @transform_3, window_bounds = array<i64: 64, 32>}, {pipeline_mode = #tpu.pipeline_mode<synchronous>, transform_indices = @transform_4, window_bounds = array<i64: 1, 32>}, {pipeline_mode = #tpu.pipeline_mode<synchronous>, transform_indices = @transform_5, window_bounds = array<i64: 32, 64>}, {pipeline_mode = #tpu.pipeline_mode<synchronous>, transform_indices = @transform_6, window_bounds = array<i64: 1, 64>}, {pipeline_mode = #tpu.pipeline_mode<synchronous>, transform_indices = @transform_7, window_bounds = array<i64: 64, 128>}, {pipeline_mode = #tpu.pipeline_mode<synchronous>, transform_indices = @transform_8, window_bounds = array<i64: 1, 128>}, {transform_indices = @transform_9, window_bounds = array<i64: 24, 128>}]} {
    %c0 = arith.constant 0 : index
    %c0_0 = arith.constant 0 : index
    %0 = vector.load %arg1[%c0, %c0_0] : memref<24x128xf32, #tpu.memory_space<vmem>>, vector<24x128xf32>
    %c0_1 = arith.constant 0 : index
    %c0_2 = arith.constant 0 : index
    %1 = vector.load %arg2[%c0_1, %c0_2] : memref<128x64xf32, #tpu.memory_space<vmem>>, vector<128x64xf32>
    %cst = arith.constant dense<0.000000e+00> : vector<24x64xf32>
    %2 = tpu.matmul %0, %1, %cst {dimension_numbers = #tpu.dot_dimension_numbers<[1], [0], [0], [1], [0, 0, 1, 1], [], []>} : vector<24x128xf32>, vector<128x64xf32>, vector<24x64xf32> -> vector<24x64xf32>
    %c0_3 = arith.constant 0 : index
    %c0_4 = arith.constant 0 : index
    %3 = vector.load %arg3[%c0_3, %c0_4] : memref<1x64xf32, #tpu.memory_space<vmem>>, vector<1x64xf32>
    %4 = vector.broadcast %3 : vector<1x64xf32> to vector<24x64xf32>
    %5 = arith.addf %2, %4 : vector<24x64xf32>
    %cst_5 = arith.constant 0.000000e+00 : f32
    %6 = vector.broadcast %cst_5 : f32 to vector<24x64xf32>
    %7 = arith.maximumf %5, %6 : vector<24x64xf32>
    %c0_6 = arith.constant 0 : index
    %c0_7 = arith.constant 0 : index
    %8 = vector.load %arg4[%c0_6, %c0_7] : memref<64x32xf32, #tpu.memory_space<vmem>>, vector<64x32xf32>
    %cst_8 = arith.constant dense<0.000000e+00> : vector<24x32xf32>
    %9 = tpu.matmul %7, %8, %cst_8 {dimension_numbers = #tpu.dot_dimension_numbers<[1], [0], [0], [1], [0, 0, 1, 1], [], []>} : vector<24x64xf32>, vector<64x32xf32>, vector<24x32xf32> -> vector<24x32xf32>
    %c0_9 = arith.constant 0 : index
    %c0_10 = arith.constant 0 : index
    %10 = vector.load %arg5[%c0_9, %c0_10] : memref<1x32xf32, #tpu.memory_space<vmem>>, vector<1x32xf32>
    %11 = vector.broadcast %10 : vector<1x32xf32> to vector<24x32xf32>
    %12 = arith.addf %9, %11 : vector<24x32xf32>
    %cst_11 = arith.constant 0.000000e+00 : f32
    %13 = vector.broadcast %cst_11 : f32 to vector<24x32xf32>
    %14 = arith.maximumf %12, %13 : vector<24x32xf32>
    %c0_12 = arith.constant 0 : index
    %c0_13 = arith.constant 0 : index
    %15 = vector.load %arg6[%c0_12, %c0_13] : memref<32x64xf32, #tpu.memory_space<vmem>>, vector<32x64xf32>
    %cst_14 = arith.constant dense<0.000000e+00> : vector<24x64xf32>
    %16 = tpu.matmul %14, %15, %cst_14 {dimension_numbers = #tpu.dot_dimension_numbers<[1], [0], [0], [1], [0, 0, 1, 1], [], []>} : vector<24x32xf32>, vector<32x64xf32>, vector<24x64xf32> -> vector<24x64xf32>
    %c0_15 = arith.constant 0 : index
    %c0_16 = arith.constant 0 : index
    %17 = vector.load %arg7[%c0_15, %c0_16] : memref<1x64xf32, #tpu.memory_space<vmem>>, vector<1x64xf32>
    %18 = vector.broadcast %17 : vector<1x64xf32> to vector<24x64xf32>
    %19 = arith.addf %16, %18 : vector<24x64xf32>
    %cst_17 = arith.constant 0.000000e+00 : f32
    %20 = vector.broadcast %cst_17 : f32 to vector<24x64xf32>
    %21 = arith.maximumf %19, %20 : vector<24x64xf32>
    %c0_18 = arith.constant 0 : index
    %c0_19 = arith.constant 0 : index
    %22 = vector.load %arg8[%c0_18, %c0_19] : memref<64x128xf32, #tpu.memory_space<vmem>>, vector<64x128xf32>
    %cst_20 = arith.constant dense<0.000000e+00> : vector<24x128xf32>
    %23 = tpu.matmul %21, %22, %cst_20 {dimension_numbers = #tpu.dot_dimension_numbers<[1], [0], [0], [1], [0, 0, 1, 1], [], []>} : vector<24x64xf32>, vector<64x128xf32>, vector<24x128xf32> -> vector<24x128xf32>
    %c0_21 = arith.constant 0 : index
    %c0_22 = arith.constant 0 : index
    %24 = vector.load %arg9[%c0_21, %c0_22] : memref<1x128xf32, #tpu.memory_space<vmem>>, vector<1x128xf32>
    %25 = vector.broadcast %24 : vector<1x128xf32> to vector<24x128xf32>
    %26 = arith.addf %23, %25 : vector<24x128xf32>
    %27 = arith.negf %26 : vector<24x128xf32>
    %28 = math.exp %27 : vector<24x128xf32>
    %cst_23 = arith.constant 1.000000e+00 : f32
    %29 = vector.broadcast %cst_23 : f32 to vector<24x128xf32>
    %30 = arith.addf %29, %28 : vector<24x128xf32>
    %31 = arith.divf %29, %30 : vector<24x128xf32>
    %c0_24 = arith.constant 0 : index
    %c0_25 = arith.constant 0 : index
    %32 = vector.load %arg10[%c0_24, %c0_25] : memref<24x128xf32, #tpu.memory_space<vmem>>, vector<24x128xf32>
    tpu.vector_store %arg10[%c0_24, %c0_25], %31 {strides = array<i32>} : memref<24x128xf32, #tpu.memory_space<vmem>>, vector<24x128xf32>,
    return
  }
  func.func @transform_0(%arg0: i32) -> (i32, i32) {
    %c0_i32 = arith.constant 0 : i32
    %c0_i32_0 = arith.constant 0 : i32
    return %arg0, %c0_i32 : i32, i32
  }
  func.func @transform_1(%arg0: i32) -> (i32, i32) {
    %c0_i32 = arith.constant 0 : i32
    %c0_i32_0 = arith.constant 0 : i32
    %c0_i32_1 = arith.constant 0 : i32
    return %c0_i32, %c0_i32_0 : i32, i32
  }
  func.func @transform_2(%arg0: i32) -> (i32, i32) {
    %c0_i32 = arith.constant 0 : i32
    %c0_i32_0 = arith.constant 0 : i32
    %c0_i32_1 = arith.constant 0 : i32
    return %c0_i32, %c0_i32_0 : i32, i32
  }
  func.func @transform_3(%arg0: i32) -> (i32, i32) {
    %c0_i32 = arith.constant 0 : i32
    %c0_i32_0 = arith.constant 0 : i32
    %c0_i32_1 = arith.constant 0 : i32
    return %c0_i32, %c0_i32_0 : i32, i32
  }
  func.func @transform_4(%arg0: i32) -> (i32, i32) {
    %c0_i32 = arith.constant 0 : i32
    %c0_i32_0 = arith.constant 0 : i32
    %c0_i32_1 = arith.constant 0 : i32
    return %c0_i32, %c0_i32_0 : i32, i32
  }
  func.func @transform_5(%arg0: i32) -> (i32, i32) {
    %c0_i32 = arith.constant 0 : i32
    %c0_i32_0 = arith.constant 0 : i32
    %c0_i32_1 = arith.constant 0 : i32
    return %c0_i32, %c0_i32_0 : i32, i32
  }
  func.func @transform_6(%arg0: i32) -> (i32, i32) {
    %c0_i32 = arith.constant 0 : i32
    %c0_i32_0 = arith.constant 0 : i32
    %c0_i32_1 = arith.constant 0 : i32
    return %c0_i32, %c0_i32_0 : i32, i32
  }
  func.func @transform_7(%arg0: i32) -> (i32, i32) {
    %c0_i32 = arith.constant 0 : i32
    %c0_i32_0 = arith.constant 0 : i32
    %c0_i32_1 = arith.constant 0 : i32
    return %c0_i32, %c0_i32_0 : i32, i32
  }
  func.func @transform_8(%arg0: i32) -> (i32, i32) {
    %c0_i32 = arith.constant 0 : i32
    %c0_i32_0 = arith.constant 0 : i32
    %c0_i32_1 = arith.constant 0 : i32
    return %c0_i32, %c0_i32_0 : i32, i32
  }
  func.func @transform_9(%arg0: i32) -> (i32, i32) {
    %c0_i32 = arith.constant 0 : i32
    %c0_i32_0 = arith.constant 0 : i32
    return %arg0, %c0_i32 : i32, i32
  }
}

</mosaic_0001>

<llo_original>
// kernel: tpu_custom_call.1
$region0: #{tpu_custom_call.1}
  #allocation0 [shape = 'u32[]', space=smem, size = 0x4, offset = 0x4, fixed_abs, tag = 'smem constant byte address 0x4 - core index']
  #allocation1 [shape = 'u32[144,128]{1,0:T(1,128)}', space=vmem, size = 0x12000, scoped, tag = 'internal scratch']
  %s0 = inlined_call_operand.vmem [shape: f32[48,128], index: 0, kind: input, shape index: {}]
  %s1 = inlined_call_operand.vmem [shape: f32[128,64], index: 1, kind: input, shape index: {}]
  %s2 = inlined_call_operand.vmem [shape: f32[1,64], index: 2, kind: input, shape index: {}]
  %s3 = inlined_call_operand.vmem [shape: f32[64,32], index: 3, kind: input, shape index: {}]
  %s4 = inlined_call_operand.vmem [shape: f32[1,32], index: 4, kind: input, shape index: {}]
  %s5 = inlined_call_operand.vmem [shape: f32[32,64], index: 5, kind: input, shape index: {}]
  %s6 = inlined_call_operand.vmem [shape: f32[1,64], index: 6, kind: input, shape index: {}]
  %s7 = inlined_call_operand.vmem [shape: f32[64,128], index: 7, kind: input, shape index: {}]
  %s8 = inlined_call_operand.vmem [shape: f32[1,128], index: 8, kind: input, shape index: {}]
  %s9 = inlined_call_operand.hbm [shape: f32[48,128], index: 9, kind: output, shape index: {}]
  %s10 = sld [smem:[#allocation0]]
  $region69: #{tpu_custom_call.1} parent=0
    _
  %s12 = ssub.s32 1, %s10
  %s13 = scalar_select 0, %s12, %s10
  $region1: #{tpu_custom_call.1} parent=0
    #allocation2 [shape = 'u8[24576]{0}', space=vmem, size = 0x6000, scoped, tag = 'output window, operand 0']
    #allocation3 [shape = 's32[2]{0}', space=sflag, size = 0x8, scoped, tag = 'scoped memory for tpu_custom_call.1']
    %14 = vsyncpa [#allocation3], 0
    %s15 = scalar_lea.sflag [#allocation3], 1
    %16 = vsyncpa %s15, 0
    loop: start=0, step=1, limit=4
    $region2: #{tpu_custom_call.1} parent=1 // loop_pre_header
      _
    $region3: #{tpu_custom_call.1} parent=1 // loop_header
      %s18 = sphi 0, %s22
      %p19 = scmp.ge.s32.totalorder %s18, 4
      %s28 = sphi 0, %s30
      %s31 = sphi 0, %s28
      %s32 = sphi 0, %s31
      %s48 = sphi 0, %s32
      %s52 = sphi 0, %s52
      %s54 = sphi 0, %s52
      %s55 = sphi 0, %s54
      %s69 = sphi 0, %s55
      %s73 = sphi 0, %s73
      %s75 = sphi 0, %s73
      %s76 = sphi 0, %s75
      %s90 = sphi 0, %s76
      %s94 = sphi 0, %s94
      %s96 = sphi 0, %s94
      %s97 = sphi 0, %s96
      %s111 = sphi 0, %s97
      %s115 = sphi 0, %s115
      %s117 = sphi 0, %s115
      %s118 = sphi 0, %s117
      %s132 = sphi 0, %s118
      %s136 = sphi 0, %s136
      %s138 = sphi 0, %s136
      %s139 = sphi 0, %s138
      %s153 = sphi 0, %s139
      %s157 = sphi 0, %s157
      %s159 = sphi 0, %s157
      %s160 = sphi 0, %s159
      %s174 = sphi 0, %s160
      %s178 = sphi 0, %s178
      %s180 = sphi 0, %s178
      %s181 = sphi 0, %s180
      %s195 = sphi 0, %s181
      %s199 = sphi 0, %s199
      %s201 = sphi 0, %s199
      %s202 = sphi 0, %s201
      %s216 = sphi 0, %s202
      %s222 = sphi 0, %s224
      %s225 = sphi 0, %s222
      %s226 = sphi 0, %s225
      %s242 = sphi 0, %s226
    $region4: #{tpu_custom_call.1} parent=1 // loop_header_branch
      %21 = sbr.rel (%p19) target = $region8
    $region5: #{tpu_custom_call.1} parent=1 // loop_body
      %s23 = ssub.s32 %s18, 1
      %s24 = ssub.s32 %s18, 2
      %s25 = sadd.s32 %s18, 1
      %s26 = ssub.s32 %s18, %s25
      %p27 = scmp.eq.s32.totalorder %s26, 0
      %s29 = sadd.s32 %s28, 1
      %s30 = scalar_select %p27, %s28, %s29
      %p33 = pneg %p27
      %p34 = scmp.eq.s32.totalorder %s18, 1
      %p35 = por %p33, %p34
      %p36 = scmp.ne.s32.totalorder %s28, %s31
      %p37 = scmp.eq.s32.totalorder %s18, 0
      %p38 = por %p36, %p37
      %p39 = scmp.ne.s32.totalorder %s28, %s31
      %p40 = scmp.eq.s32.totalorder %s23, 1
      %p41 = por %p39, %p40
      %p42 = scmp.ne.s32.totalorder %s31, %s32
      %p43 = scmp.eq.s32.totalorder %s23, 0
      %p44 = por %p42, %p43
      %p45 = scmp.ne.s32.totalorder %s31, %s32
      %p46 = scmp.eq.s32.totalorder %s24, 1
      %p47 = por %p45, %p46
      %p49 = scmp.ne.s32.totalorder %s32, %s48
      %p50 = scmp.eq.s32.totalorder %s24, 0
      %p51 = por %p49, %p50
      %s53 = sadd.s32 %s52, 1
      %p56 = scmp.eq.s32.totalorder %s18, 1
      %p57 = scmp.ne.s32.totalorder %s52, %s54
      %p58 = scmp.eq.s32.totalorder %s18, 0
      %p59 = por %p57, %p58
      %p60 = scmp.ne.s32.totalorder %s52, %s54
      %p61 = scmp.eq.s32.totalorder %s23, 1
      %p62 = por %p60, %p61
      %p63 = scmp.ne.s32.totalorder %s54, %s55
      %p64 = scmp.eq.s32.totalorder %s23, 0
      %p65 = por %p63, %p64
      %p66 = scmp.ne.s32.totalorder %s54, %s55
      %p67 = scmp.eq.s32.totalorder %s24, 1
      %p68 = por %p66, %p67
      %p70 = scmp.ne.s32.totalorder %s55, %s69
      %p71 = scmp.eq.s32.totalorder %s24, 0
      %p72 = por %p70, %p71
      %s74 = sadd.s32 %s73, 1
      %p77 = scmp.eq.s32.totalorder %s18, 1
      %p78 = scmp.ne.s32.totalorder %s73, %s75
      %p79 = scmp.eq.s32.totalorder %s18, 0
      %p80 = por %p78, %p79
      %p81 = scmp.ne.s32.totalorder %s73, %s75
      %p82 = scmp.eq.s32.totalorder %s23, 1
      %p83 = por %p81, %p82
      %p84 = scmp.ne.s32.totalorder %s75, %s76
      %p85 = scmp.eq.s32.totalorder %s23, 0
      %p86 = por %p84, %p85
      %p87 = scmp.ne.s32.totalorder %s75, %s76
      %p88 = scmp.eq.s32.totalorder %s24, 1
      %p89 = por %p87, %p88
      %p91 = scmp.ne.s32.totalorder %s76, %s90
      %p92 = scmp.eq.s32.totalorder %s24, 0
      %p93 = por %p91, %p92
      %s95 = sadd.s32 %s94, 1
      %p98 = scmp.eq.s32.totalorder %s18, 1
      %p99 = scmp.ne.s32.totalorder %s94, %s96
      %p100 = scmp.eq.s32.totalorder %s18, 0
      %p101 = por %p99, %p100
      %p102 = scmp.ne.s32.totalorder %s94, %s96
      %p103 = scmp.eq.s32.totalorder %s23, 1
      %p104 = por %p102, %p103
      %p105 = scmp.ne.s32.totalorder %s96, %s97
      %p106 = scmp.eq.s32.totalorder %s23, 0
      %p107 = por %p105, %p106
      %p108 = scmp.ne.s32.totalorder %s96, %s97
      %p109 = scmp.eq.s32.totalorder %s24, 1
      %p110 = por %p108, %p109
      %p112 = scmp.ne.s32.totalorder %s97, %s111
      %p113 = scmp.eq.s32.totalorder %s24, 0
      %p114 = por %p112, %p113
      %s116 = sadd.s32 %s115, 1
      %p119 = scmp.eq.s32.totalorder %s18, 1
      %p120 = scmp.ne.s32.totalorder %s115, %s117
      %p121 = scmp.eq.s32.totalorder %s18, 0
      %p122 = por %p120, %p121
      %p123 = scmp.ne.s32.totalorder %s115, %s117
      %p124 = scmp.eq.s32.totalorder %s23, 1
      %p125 = por %p123, %p124
      %p126 = scmp.ne.s32.totalorder %s117, %s118
      %p127 = scmp.eq.s32.totalorder %s23, 0
      %p128 = por %p126, %p127
      %p129 = scmp.ne.s32.totalorder %s117, %s118
      %p130 = scmp.eq.s32.totalorder %s24, 1
      %p131 = por %p129, %p130
      %p133 = scmp.ne.s32.totalorder %s118, %s132
      %p134 = scmp.eq.s32.totalorder %s24, 0
      %p135 = por %p133, %p134
      %s137 = sadd.s32 %s136, 1
      %p140 = scmp.eq.s32.totalorder %s18, 1
      %p141 = scmp.ne.s32.totalorder %s136, %s138
      %p142 = scmp.eq.s32.totalorder %s18, 0
      %p143 = por %p141, %p142
      %p144 = scmp.ne.s32.totalorder %s136, %s138
      %p145 = scmp.eq.s32.totalorder %s23, 1
      %p146 = por %p144, %p145
      %p147 = scmp.ne.s32.totalorder %s138, %s139
      %p148 = scmp.eq.s32.totalorder %s23, 0
      %p149 = por %p147, %p148
      %p150 = scmp.ne.s32.totalorder %s138, %s139
      %p151 = scmp.eq.s32.totalorder %s24, 1
      %p152 = por %p150, %p151
      %p154 = scmp.ne.s32.totalorder %s139, %s153
      %p155 = scmp.eq.s32.totalorder %s24, 0
      %p156 = por %p154, %p155
      %s158 = sadd.s32 %s157, 1
      %p161 = scmp.eq.s32.totalorder %s18, 1
      %p162 = scmp.ne.s32.totalorder %s157, %s159
      %p163 = scmp.eq.s32.totalorder %s18, 0
      %p164 = por %p162, %p163
      %p165 = scmp.ne.s32.totalorder %s157, %s159
      %p166 = scmp.eq.s32.totalorder %s23, 1
      %p167 = por %p165, %p166
      %p168 = scmp.ne.s32.totalorder %s159, %s160
      %p169 = scmp.eq.s32.totalorder %s23, 0
      %p170 = por %p168, %p169
      %p171 = scmp.ne.s32.totalorder %s159, %s160
      %p172 = scmp.eq.s32.totalorder %s24, 1
      %p173 = por %p171, %p172
      %p175 = scmp.ne.s32.totalorder %s160, %s174
      %p176 = scmp.eq.s32.totalorder %s24, 0
      %p177 = por %p175, %p176
      %s179 = sadd.s32 %s178, 1
      %p182 = scmp.eq.s32.totalorder %s18, 1
      %p183 = scmp.ne.s32.totalorder %s178, %s180
      %p184 = scmp.eq.s32.totalorder %s18, 0
      %p185 = por %p183, %p184
      %p186 = scmp.ne.s32.totalorder %s178, %s180
      %p187 = scmp.eq.s32.totalorder %s23, 1
      %p188 = por %p186, %p187
      %p189 = scmp.ne.s32.totalorder %s180, %s181
      %p190 = scmp.eq.s32.totalorder %s23, 0
      %p191 = por %p189, %p190
      %p192 = scmp.ne.s32.totalorder %s180, %s181
      %p193 = scmp.eq.s32.totalorder %s24, 1
      %p194 = por %p192, %p193
      %p196 = scmp.ne.s32.totalorder %s181, %s195
      %p197 = scmp.eq.s32.totalorder %s24, 0
      %p198 = por %p196, %p197
      %s200 = sadd.s32 %s199, 1
      %p203 = scmp.eq.s32.totalorder %s18, 1
      %p204 = scmp.ne.s32.totalorder %s199, %s201
      %p205 = scmp.eq.s32.totalorder %s18, 0
      %p206 = por %p204, %p205
      %p207 = scmp.ne.s32.totalorder %s199, %s201
      %p208 = scmp.eq.s32.totalorder %s23, 1
      %p209 = por %p207, %p208
      %p210 = scmp.ne.s32.totalorder %s201, %s202
      %p211 = scmp.eq.s32.totalorder %s23, 0
      %p212 = por %p210, %p211
      %p213 = scmp.ne.s32.totalorder %s201, %s202
      %p214 = scmp.eq.s32.totalorder %s24, 1
      %p215 = por %p213, %p214
      %p217 = scmp.ne.s32.totalorder %s202, %s216
      %p218 = scmp.eq.s32.totalorder %s24, 0
      %p219 = por %p217, %p218
      %s220 = ssub.s32 %s18, %s25
      %p221 = scmp.eq.s32.totalorder %s220, 0
      %s223 = sadd.s32 %s222, 1
      %s224 = scalar_select %p221, %s222, %s223
      %p227 = pneg %p221
      %p228 = scmp.eq.s32.totalorder %s18, 1
      %p229 = por %p227, %p228
      %p230 = scmp.ne.s32.totalorder %s222, %s225
      %p231 = scmp.eq.s32.totalorder %s18, 0
      %p232 = por %p230, %p231
      %p233 = scmp.ne.s32.totalorder %s222, %s225
      %p234 = scmp.eq.s32.totalorder %s23, 1
      %p235 = por %p233, %p234
      %p236 = scmp.ne.s32.totalorder %s225, %s226
      %p237 = scmp.eq.s32.totalorder %s23, 0
      %p238 = por %p236, %p237
      %p239 = scmp.ne.s32.totalorder %s225, %s226
      %p240 = scmp.eq.s32.totalorder %s24, 1
      %p241 = por %p239, %p240
      %p243 = scmp.ne.s32.totalorder %s226, %s242
      %p244 = scmp.eq.s32.totalorder %s24, 0
      %p245 = por %p243, %p244
      %p246 = scmp.le.s32.totalorder 1, %s18
      %p247 = scmp.lt.s32.totalorder %s18, 3
      %p248 = pnand %p246, %p247
      %p249 = pneg %p248
      // Predicated region
      $region9: #{tpu_custom_call.1} parent=5 // pred_check
        _
      $region10: #{tpu_custom_call.1} parent=5 // pred_check_branch
        %251 = sbr.rel (%p248) target = $region12
      $region11: #{tpu_custom_call.1} parent=5 // pred_region
        %s252 = ssub.s32 %s18, 1
        // Predicated region
        $region13: #{tpu_custom_call.1} parent=11 // pred_check
          %p253 = pneg %p65
        $region14: #{tpu_custom_call.1} parent=11 // pred_check_branch
          %255 = sbr.rel (%p253) target = $region16
        $region15: #{tpu_custom_call.1} parent=11 // pred_region
          _
        $region16: #{tpu_custom_call.1} parent=11 // pred_fallthru
          _
        // Predicated region
        $region17: #{tpu_custom_call.1} parent=11 // pred_check
          %p256 = pneg %p86
        $region18: #{tpu_custom_call.1} parent=11 // pred_check_branch
          %258 = sbr.rel (%p256) target = $region20
        $region19: #{tpu_custom_call.1} parent=11 // pred_region
          _
        $region20: #{tpu_custom_call.1} parent=11 // pred_fallthru
          _
        // Predicated region
        $region21: #{tpu_custom_call.1} parent=11 // pred_check
          %p259 = pneg %p107
        $region22: #{tpu_custom_call.1} parent=11 // pred_check_branch
          %261 = sbr.rel (%p259) target = $region24
        $region23: #{tpu_custom_call.1} parent=11 // pred_region
          _
        $region24: #{tpu_custom_call.1} parent=11 // pred_fallthru
          _
        // Predicated region
        $region25: #{tpu_custom_call.1} parent=11 // pred_check
          %p262 = pneg %p128
        $region26: #{tpu_custom_call.1} parent=11 // pred_check_branch
          %264 = sbr.rel (%p262) target = $region28
        $region27: #{tpu_custom_call.1} parent=11 // pred_region
          _
        $region28: #{tpu_custom_call.1} parent=11 // pred_fallthru
          _
        // Predicated region
        $region29: #{tpu_custom_call.1} parent=11 // pred_check
          %p265 = pneg %p149
        $region30: #{tpu_custom_call.1} parent=11 // pred_check_branch
          %267 = sbr.rel (%p265) target = $region32
        $region31: #{tpu_custom_call.1} parent=11 // pred_region
          _
        $region32: #{tpu_custom_call.1} parent=11 // pred_fallthru
          _
        // Predicated region
        $region33: #{tpu_custom_call.1} parent=11 // pred_check
          %p268 = pneg %p170
        $region34: #{tpu_custom_call.1} parent=11 // pred_check_branch
          %270 = sbr.rel (%p268) target = $region36
        $region35: #{tpu_custom_call.1} parent=11 // pred_region
          _
        $region36: #{tpu_custom_call.1} parent=11 // pred_fallthru
          _
        // Predicated region
        $region37: #{tpu_custom_call.1} parent=11 // pred_check
          %p271 = pneg %p191
        $region38: #{tpu_custom_call.1} parent=11 // pred_check_branch
          %273 = sbr.rel (%p271) target = $region40
        $region39: #{tpu_custom_call.1} parent=11 // pred_region
          _
        $region40: #{tpu_custom_call.1} parent=11 // pred_fallthru
          _
        // Predicated region
        $region41: #{tpu_custom_call.1} parent=11 // pred_check
          %p274 = pneg %p212
        $region42: #{tpu_custom_call.1} parent=11 // pred_check_branch
          %276 = sbr.rel (%p274) target = $region44
        $region43: #{tpu_custom_call.1} parent=11 // pred_region
          _
        $region44: #{tpu_custom_call.1} parent=11 // pred_fallthru
          _
      $region12: #{tpu_custom_call.1} parent=5 // pred_fallthru
        _
      %p277 = scmp.lt.s32.totalorder %s18, 2
      // Predicated region
      $region45: #{tpu_custom_call.1} parent=5 // pred_check
        %p278 = pneg %p277
      $region46: #{tpu_custom_call.1} parent=5 // pred_check_branch
        %280 = sbr.rel (%p278) target = $region48
      $region47: #{tpu_custom_call.1} parent=5 // pred_region
        // Predicated region
        $region49: #{tpu_custom_call.1} parent=47 // pred_check
          %p281 = pneg %p38
        $region50: #{tpu_custom_call.1} parent=47 // pred_check_branch
          %283 = sbr.rel (%p281) target = $region52
        $region51: #{tpu_custom_call.1} parent=47 // pred_region
          %s284 = smul.u32 3, %s18
          %p285 = scmp.lt.s32.totalorder %s284, 5
          %s286 = scalar_select %p285, %s284, 5
          %s287 = smul.addr %s286, 8
          %s288 = scalar_lea.vmem %s0, %s287
          %s289 = smul.u32 3, %s18
        $region52: #{tpu_custom_call.1} parent=47 // pred_fallthru
          _
      $region48: #{tpu_custom_call.1} parent=5 // pred_fallthru
        _
      %p290 = scmp.le.s32.totalorder 1, %s18
      %p291 = scmp.lt.s32.totalorder %s18, 3
      %p292 = pnand %p290, %p291
      %p293 = pneg %p292
      // Predicated region
      $region53: #{tpu_custom_call.1} parent=5 // pred_check
        _
      $region54: #{tpu_custom_call.1} parent=5 // pred_check_branch
        %295 = sbr.rel (%p292) target = $region56
      $region55: #{tpu_custom_call.1} parent=5 // pred_region
        %s296 = ssub.s32 %s18, 1
        %s297 = smul.u32 3, %s23
        %p298 = scmp.lt.s32.totalorder %s297, 5
        %s299 = scalar_select %p298, %s297, 5
        %s300 = smul.addr %s299, 8
        %s301 = scalar_lea.vmem %s0, %s300
        %p302 = pneg %p44
        %p303 = pneg %p41
        %p304 = pneg %p65
        %p305 = pneg %p62
        %p306 = pneg %p86
        %p307 = pneg %p83
        %p308 = pneg %p107
        %p309 = pneg %p104
        %p310 = pneg %p128
        %p311 = pneg %p125
        %p312 = pneg %p149
        %p313 = pneg %p146
        %p314 = pneg %p170
        %p315 = pneg %p167
        %p316 = pneg %p191
        %p317 = pneg %p188
        %p318 = pneg %p212
        %p319 = pneg %p209
        %p320 = pneg %p238
        %p321 = pneg %p235
        %s322 = sand.u32 %s225, 1
        %s323 = scalar_lea.sflag [#allocation3], %s322
        %s324 = sand.u32 %s225, 1
        %s325 = smul.addr %s324, 24
        %s326 = scalar_lea.vmem [#allocation2], %s325
        %s327 = smul.u32 3, %s23
        %p328 = scmp.lt.s32.totalorder %s327, 5
        %s329 = scalar_select %p328, %s327, 5
        %s330 = smul.addr %s329, 8
        %s331 = scalar_lea.vmem %s0, %s330
        %s332 = smul.u32 3, %s23
        %s333 = smul.u32 3, %s23
        %v334 = vld [vmem:[%s331] sm:$0xff]
        %v335 = vld [vmem:[%s331 + $0x8] sm:$0xff]
        %v336 = vld [vmem:[%s331 + $0x10] sm:$0xff]
        %v337 = vld [vmem:[%s1] sm:$0xff]
        %v338 = vld [vmem:[%s1 + $0x8] sm:$0xff]
        %v339 = vld [vmem:[%s1 + $0x10] sm:$0xff]
        %v340 = vld [vmem:[%s1 + $0x18] sm:$0xff]
        %v341 = vld [vmem:[%s1 + $0x20] sm:$0xff]
        %v342 = vld [vmem:[%s1 + $0x28] sm:$0xff]
        %v343 = vld [vmem:[%s1 + $0x30] sm:$0xff]
        %v344 = vld [vmem:[%s1 + $0x38] sm:$0xff]
        %v345 = vld [vmem:[%s1 + $0x40] sm:$0xff]
        %v346 = vld [vmem:[%s1 + $0x48] sm:$0xff]
        %v347 = vld [vmem:[%s1 + $0x50] sm:$0xff]
        %v348 = vld [vmem:[%s1 + $0x58] sm:$0xff]
        %v349 = vld [vmem:[%s1 + $0x60] sm:$0xff]
        %v350 = vld [vmem:[%s1 + $0x68] sm:$0xff]
        %v351 = vld [vmem:[%s1 + $0x70] sm:$0xff]
        %v352 = vld [vmem:[%s1 + $0x78] sm:$0xff]
        %v353 = vld [vmem:[%s2] sm:$0x1]
        %v355 = vlaneseq
        %v356 = vshrl.u32 %v355, 7
        %v357 = vsub.s32 0, %v356
        %v358 = vrot.slane %v353, %v357
        %360 = vmatprep.subr.mxu0 0.0
        %361 = vmatpush1.msra.mxu0 %v352
        %362 = vmatprep.subr.mxu0 0.0
        %363 = vmatpush1.msra.mxu0 %v351
        %364 = vmatprep.subr.mxu0 0.0
        %365 = vmatpush1.msra.mxu0 %v350
        %366 = vmatprep.subr.mxu0 0.0
        %367 = vmatpush1.msra.mxu0 %v349
        %368 = vmatprep.subr.mxu0 0.0
        %369 = vmatpush1.msra.mxu0 %v348
        %370 = vmatprep.subr.mxu0 0.0
        %371 = vmatpush1.msra.mxu0 %v347
        %372 = vmatprep.subr.mxu0 0.0
        %373 = vmatpush1.msra.mxu0 %v346
        %374 = vmatprep.subr.mxu0 0.0
        %375 = vmatpush1.msra.mxu0 %v345
        %376 = vmatprep.subr.mxu0 0.0
        %377 = vmatpush1.msra.mxu0 %v344
        %378 = vmatprep.subr.mxu0 0.0
        %379 = vmatpush1.msra.mxu0 %v343
        %380 = vmatprep.subr.mxu0 0.0
        %381 = vmatpush1.msra.mxu0 %v342
        %382 = vmatprep.subr.mxu0 0.0
        %383 = vmatpush1.msra.mxu0 %v341
        %384 = vmatprep.subr.mxu0 0.0
        %385 = vmatpush1.msra.mxu0 %v340
        %386 = vmatprep.subr.mxu0 0.0
        %387 = vmatpush1.msra.mxu0 %v339
        %388 = vmatprep.subr.mxu0 0.0
        %389 = vmatpush1.msra.mxu0 %v338
        %390 = vmatprep.subr.mxu0 0.0
        %391 = vmatpush1.msra.mxu0 %v337
        %392 = vmatprep.subr.mxu0 0.0
        %393 = vmatpush2.msra.mxu0 0.0
        %394 = vmatprep.subr.mxu0 0.0
        %395 = vmatpush2.msra.mxu0 0.0
        %396 = vmatprep.subr.mxu0 0.0
        %397 = vmatpush2.msra.mxu0 0.0
        %398 = vmatprep.subr.mxu0 0.0
        %399 = vmatpush2.msra.mxu0 0.0
        %400 = vmatprep.subr.mxu0 0.0
        %401 = vmatpush2.msra.mxu0 0.0
        %402 = vmatprep.subr.mxu0 0.0
        %403 = vmatpush2.msra.mxu0 0.0
        %404 = vmatprep.subr.mxu0 0.0
        %405 = vmatpush2.msra.mxu0 0.0
        %406 = vmatprep.subr.mxu0 0.0
        %407 = vmatpush2.msra.mxu0 0.0
        %408 = vmatprep.subr.mxu0 0.0
        %409 = vmatpush2.msra.mxu0 0.0
        %410 = vmatprep.subr.mxu0 0.0
        %411 = vmatpush2.msra.mxu0 0.0
        %412 = vmatprep.subr.mxu0 0.0
        %413 = vmatpush2.msra.mxu0 0.0
        %414 = vmatprep.subr.mxu0 0.0
        %415 = vmatpush2.msra.mxu0 0.0
        %416 = vmatprep.subr.mxu0 0.0
        %417 = vmatpush2.msra.mxu0 0.0
        %418 = vmatprep.subr.mxu0 0.0
        %419 = vmatpush2.msra.mxu0 0.0
        %420 = vmatprep.subr.mxu0 0.0
        %421 = vmatpush2.msra.mxu0 0.0
        %422 = vmatprep.subr.mxu0 0.0
        %423 = vmatpush2.msra.mxu0 0.0
        %424 = vmatprep.mubr.f32.mxu0 0.0
        %425 = vmatmul.mubr.f32.gmra.mxu0 %v334
        %v426 = vpop.f32.mrf.mxu0
        %v427 = vadd.f32 %v358, %v426
        %v428 = vpop.f32.mrf.mxu0
        %429 = vmatprep.mubr.f32.mxu0 0.0
        %430 = vmatmul.mubr.f32.gmra.mxu0 %v335
        %v431 = vpop.f32.mrf.mxu0
        %v432 = vadd.f32 %v358, %v431
        %v433 = vpop.f32.mrf.mxu0
        %434 = vmatprep.mubr.f32.mxu0 0.0
        %435 = vmatmul.mubr.f32.gmra.mxu0 %v336
        %v436 = vpop.f32.mrf.mxu0
        %v437 = vadd.f32 %v358, %v436
        %v438 = vpop.f32.mrf.mxu0
        %439 = vdwg.mxu0
        %v440 = vmax.f32 %v427, 0.0
        %v441 = vmax.f32 %v432, 0.0
        %v442 = vmax.f32 %v437, 0.0
        %v443 = vld [vmem:[%s3] sm:$0xff]
        %v444 = vld [vmem:[%s3 + $0x8] sm:$0xff]
        %v445 = vld [vmem:[%s3 + $0x10] sm:$0xff]
        %v446 = vld [vmem:[%s3 + $0x18] sm:$0xff]
        %v447 = vld [vmem:[%s3 + $0x20] sm:$0xff]
        %v448 = vld [vmem:[%s3 + $0x28] sm:$0xff]
        %v449 = vld [vmem:[%s3 + $0x30] sm:$0xff]
        %v450 = vld [vmem:[%s3 + $0x38] sm:$0xff]
        %v451 = vld [vmem:[%s4] sm:$0x1]
        %v453 = vlaneseq
        %v454 = vshrl.u32 %v453, 7
        %v455 = vsub.s32 0, %v454
        %v456 = vrot.slane %v451, %v455
        %vm458 = vcmask 523264
        %v460 = vsel %vm458, %v440, 0
        %v463 = vsel %vm458, %v441, 0
        %v466 = vsel %vm458, %v442, 0
        %468 = vmatprep.subr.mxu0 0.0
        %469 = vmatpush1.msra.mxu0 0.0
        %470 = vmatprep.subr.mxu0 0.0
        %471 = vmatpush1.msra.mxu0 0.0
        %472 = vmatprep.subr.mxu0 0.0
        %473 = vmatpush1.msra.mxu0 0.0
        %474 = vmatprep.subr.mxu0 0.0
        %475 = vmatpush1.msra.mxu0 0.0
        %476 = vmatprep.subr.mxu0 0.0
        %477 = vmatpush1.msra.mxu0 0.0
        %478 = vmatprep.subr.mxu0 0.0
        %479 = vmatpush1.msra.mxu0 0.0
        %480 = vmatprep.subr.mxu0 0.0
        %481 = vmatpush1.msra.mxu0 0.0
        %482 = vmatprep.subr.mxu0 0.0
        %483 = vmatpush1.msra.mxu0 0.0
        %484 = vmatprep.subr.mxu0 0.0
        %485 = vmatpush1.msra.mxu0 %v450
        %486 = vmatprep.subr.mxu0 0.0
        %487 = vmatpush1.msra.mxu0 %v449
        %488 = vmatprep.subr.mxu0 0.0
        %489 = vmatpush1.msra.mxu0 %v448
        %490 = vmatprep.subr.mxu0 0.0
        %491 = vmatpush1.msra.mxu0 %v447
        %492 = vmatprep.subr.mxu0 0.0
        %493 = vmatpush1.msra.mxu0 %v446
        %494 = vmatprep.subr.mxu0 0.0
        %495 = vmatpush1.msra.mxu0 %v445
        %496 = vmatprep.subr.mxu0 0.0
        %497 = vmatpush1.msra.mxu0 %v444
        %498 = vmatprep.subr.mxu0 0.0
        %499 = vmatpush1.msra.mxu0 %v443
        %500 = vmatprep.subr.mxu0 0.0
        %501 = vmatpush2.msra.mxu0 0.0
        %502 = vmatprep.subr.mxu0 0.0
        %503 = vmatpush2.msra.mxu0 0.0
        %504 = vmatprep.subr.mxu0 0.0
        %505 = vmatpush2.msra.mxu0 0.0
        %506 = vmatprep.subr.mxu0 0.0
        %507 = vmatpush2.msra.mxu0 0.0
        %508 = vmatprep.subr.mxu0 0.0
        %509 = vmatpush2.msra.mxu0 0.0
        %510 = vmatprep.subr.mxu0 0.0
        %511 = vmatpush2.msra.mxu0 0.0
        %512 = vmatprep.subr.mxu0 0.0
        %513 = vmatpush2.msra.mxu0 0.0
        %514 = vmatprep.subr.mxu0 0.0
        %515 = vmatpush2.msra.mxu0 0.0
        %516 = vmatprep.subr.mxu0 0.0
        %517 = vmatpush2.msra.mxu0 0.0
        %518 = vmatprep.subr.mxu0 0.0
        %519 = vmatpush2.msra.mxu0 0.0
        %520 = vmatprep.subr.mxu0 0.0
        %521 = vmatpush2.msra.mxu0 0.0
        %522 = vmatprep.subr.mxu0 0.0
        %523 = vmatpush2.msra.mxu0 0.0
        %524 = vmatprep.subr.mxu0 0.0
        %525 = vmatpush2.msra.mxu0 0.0
        %526 = vmatprep.subr.mxu0 0.0
        %527 = vmatpush2.msra.mxu0 0.0
        %528 = vmatprep.subr.mxu0 0.0
        %529 = vmatpush2.msra.mxu0 0.0
        %530 = vmatprep.subr.mxu0 0.0
        %531 = vmatpush2.msra.mxu0 0.0
        %532 = vmatprep.mubr.f32.mxu0 0.0
        %533 = vmatmul.mubr.f32.gmra.mxu0 %v460
        %v534 = vpop.f32.mrf.mxu0
        %v535 = vadd.f32 %v456, %v534
        %v536 = vpop.f32.mrf.mxu0
        %537 = vmatprep.mubr.f32.mxu0 0.0
        %538 = vmatmul.mubr.f32.gmra.mxu0 %v463
        %v539 = vpop.f32.mrf.mxu0
        %v540 = vadd.f32 %v456, %v539
        %v541 = vpop.f32.mrf.mxu0
        %542 = vmatprep.mubr.f32.mxu0 0.0
        %543 = vmatmul.mubr.f32.gmra.mxu0 %v466
        %v544 = vpop.f32.mrf.mxu0
        %v545 = vadd.f32 %v456, %v544
        %v546 = vpop.f32.mrf.mxu0
        %547 = vdwg.mxu0
        %v548 = vmax.f32 %v535, 0.0
        %v549 = vmax.f32 %v540, 0.0
        %v550 = vmax.f32 %v545, 0.0
        %v551 = vld [vmem:[%s5] sm:$0xff]
        %v552 = vld [vmem:[%s5 + $0x8] sm:$0xff]
        %v553 = vld [vmem:[%s5 + $0x10] sm:$0xff]
        %v554 = vld [vmem:[%s5 + $0x18] sm:$0xff]
        %v555 = vld [vmem:[%s6] sm:$0x1]
        %v557 = vlaneseq
        %v558 = vshrl.u32 %v557, 7
        %v559 = vsub.s32 0, %v558
        %v560 = vrot.slane %v555, %v559
        %vm562 = vcmask 261120
        %v564 = vsel %vm562, %v548, 0
        %v567 = vsel %vm562, %v549, 0
        %v570 = vsel %vm562, %v550, 0
        %572 = vmatprep.subr.mxu0 0.0
        %573 = vmatpush1.msra.mxu0 0.0
        %574 = vmatprep.subr.mxu0 0.0
        %575 = vmatpush1.msra.mxu0 0.0
        %576 = vmatprep.subr.mxu0 0.0
        %577 = vmatpush1.msra.mxu0 0.0
        %578 = vmatprep.subr.mxu0 0.0
        %579 = vmatpush1.msra.mxu0 0.0
        %580 = vmatprep.subr.mxu0 0.0
        %581 = vmatpush1.msra.mxu0 0.0
        %582 = vmatprep.subr.mxu0 0.0
        %583 = vmatpush1.msra.mxu0 0.0
        %584 = vmatprep.subr.mxu0 0.0
        %585 = vmatpush1.msra.mxu0 0.0
        %586 = vmatprep.subr.mxu0 0.0
        %587 = vmatpush1.msra.mxu0 0.0
        %588 = vmatprep.subr.mxu0 0.0
        %589 = vmatpush1.msra.mxu0 0.0
        %590 = vmatprep.subr.mxu0 0.0
        %591 = vmatpush1.msra.mxu0 0.0
        %592 = vmatprep.subr.mxu0 0.0
        %593 = vmatpush1.msra.mxu0 0.0
        %594 = vmatprep.subr.mxu0 0.0
        %595 = vmatpush1.msra.mxu0 0.0
        %596 = vmatprep.subr.mxu0 0.0
        %597 = vmatpush1.msra.mxu0 %v554
        %598 = vmatprep.subr.mxu0 0.0
        %599 = vmatpush1.msra.mxu0 %v553
        %600 = vmatprep.subr.mxu0 0.0
        %601 = vmatpush1.msra.mxu0 %v552
        %602 = vmatprep.subr.mxu0 0.0
        %603 = vmatpush1.msra.mxu0 %v551
        %604 = vmatprep.subr.mxu0 0.0
        %605 = vmatpush2.msra.mxu0 0.0
        %606 = vmatprep.subr.mxu0 0.0
        %607 = vmatpush2.msra.mxu0 0.0
        %608 = vmatprep.subr.mxu0 0.0
        %609 = vmatpush2.msra.mxu0 0.0
        %610 = vmatprep.subr.mxu0 0.0
        %611 = vmatpush2.msra.mxu0 0.0
        %612 = vmatprep.subr.mxu0 0.0
        %613 = vmatpush2.msra.mxu0 0.0
        %614 = vmatprep.subr.mxu0 0.0
        %615 = vmatpush2.msra.mxu0 0.0
        %616 = vmatprep.subr.mxu0 0.0
        %617 = vmatpush2.msra.mxu0 0.0
        %618 = vmatprep.subr.mxu0 0.0
        %619 = vmatpush2.msra.mxu0 0.0
        %620 = vmatprep.subr.mxu0 0.0
        %621 = vmatpush2.msra.mxu0 0.0
        %622 = vmatprep.subr.mxu0 0.0
        %623 = vmatpush2.msra.mxu0 0.0
        %624 = vmatprep.subr.mxu0 0.0
        %625 = vmatpush2.msra.mxu0 0.0
        %626 = vmatprep.subr.mxu0 0.0
        %627 = vmatpush2.msra.mxu0 0.0
        %628 = vmatprep.subr.mxu0 0.0
        %629 = vmatpush2.msra.mxu0 0.0
        %630 = vmatprep.subr.mxu0 0.0
        %631 = vmatpush2.msra.mxu0 0.0
        %632 = vmatprep.subr.mxu0 0.0
        %633 = vmatpush2.msra.mxu0 0.0
        %634 = vmatprep.subr.mxu0 0.0
        %635 = vmatpush2.msra.mxu0 0.0
        %636 = vmatprep.mubr.f32.mxu0 0.0
        %637 = vmatmul.mubr.f32.gmra.mxu0 %v564
        %v638 = vpop.f32.mrf.mxu0
        %v639 = vadd.f32 %v560, %v638
        %v640 = vpop.f32.mrf.mxu0
        %641 = vmatprep.mubr.f32.mxu0 0.0
        %642 = vmatmul.mubr.f32.gmra.mxu0 %v567
        %v643 = vpop.f32.mrf.mxu0
        %v644 = vadd.f32 %v560, %v643
        %v645 = vpop.f32.mrf.mxu0
        %646 = vmatprep.mubr.f32.mxu0 0.0
        %647 = vmatmul.mubr.f32.gmra.mxu0 %v570
        %v648 = vpop.f32.mrf.mxu0
        %v649 = vadd.f32 %v560, %v648
        %v650 = vpop.f32.mrf.mxu0
        %651 = vdwg.mxu0
        %v652 = vmax.f32 %v639, 0.0
        %v653 = vmax.f32 %v644, 0.0
        %v654 = vmax.f32 %v649, 0.0
        %v655 = vld [vmem:[%s7] sm:$0xff]
        %v656 = vld [vmem:[%s7 + $0x8] sm:$0xff]
        %v657 = vld [vmem:[%s7 + $0x10] sm:$0xff]
        %v658 = vld [vmem:[%s7 + $0x18] sm:$0xff]
        %v659 = vld [vmem:[%s7 + $0x20] sm:$0xff]
        %v660 = vld [vmem:[%s7 + $0x28] sm:$0xff]
        %v661 = vld [vmem:[%s7 + $0x30] sm:$0xff]
        %v662 = vld [vmem:[%s7 + $0x38] sm:$0xff]
        %v663 = vld [vmem:[%s8] sm:$0x1]
        %v665 = vlaneseq
        %v666 = vshrl.u32 %v665, 7
        %v667 = vsub.s32 0, %v666
        %v668 = vrot.slane %v663, %v667
        %v671 = vsel %vm458, %v652, 0
        %v674 = vsel %vm458, %v653, 0
        %v677 = vsel %vm458, %v654, 0
        %679 = vmatprep.subr.mxu0 0.0
        %680 = vmatpush1.msra.mxu0 0.0
        %681 = vmatprep.subr.mxu0 0.0
        %682 = vmatpush1.msra.mxu0 0.0
        %683 = vmatprep.subr.mxu0 0.0
        %684 = vmatpush1.msra.mxu0 0.0
        %685 = vmatprep.subr.mxu0 0.0
        %686 = vmatpush1.msra.mxu0 0.0
        %687 = vmatprep.subr.mxu0 0.0
        %688 = vmatpush1.msra.mxu0 0.0
        %689 = vmatprep.subr.mxu0 0.0
        %690 = vmatpush1.msra.mxu0 0.0
        %691 = vmatprep.subr.mxu0 0.0
        %692 = vmatpush1.msra.mxu0 0.0
        %693 = vmatprep.subr.mxu0 0.0
        %694 = vmatpush1.msra.mxu0 0.0
        %695 = vmatprep.subr.mxu0 0.0
        %696 = vmatpush1.msra.mxu0 %v662
        %697 = vmatprep.subr.mxu0 0.0
        %698 = vmatpush1.msra.mxu0 %v661
        %699 = vmatprep.subr.mxu0 0.0
        %700 = vmatpush1.msra.mxu0 %v660
        %701 = vmatprep.subr.mxu0 0.0
        %702 = vmatpush1.msra.mxu0 %v659
        %703 = vmatprep.subr.mxu0 0.0
        %704 = vmatpush1.msra.mxu0 %v658
        %705 = vmatprep.subr.mxu0 0.0
        %706 = vmatpush1.msra.mxu0 %v657
        %707 = vmatprep.subr.mxu0 0.0
        %708 = vmatpush1.msra.mxu0 %v656
        %709 = vmatprep.subr.mxu0 0.0
        %710 = vmatpush1.msra.mxu0 %v655
        %711 = vmatprep.subr.mxu0 0.0
        %712 = vmatpush2.msra.mxu0 0.0
        %713 = vmatprep.subr.mxu0 0.0
        %714 = vmatpush2.msra.mxu0 0.0
        %715 = vmatprep.subr.mxu0 0.0
        %716 = vmatpush2.msra.mxu0 0.0
        %717 = vmatprep.subr.mxu0 0.0
        %718 = vmatpush2.msra.mxu0 0.0
        %719 = vmatprep.subr.mxu0 0.0
        %720 = vmatpush2.msra.mxu0 0.0
        %721 = vmatprep.subr.mxu0 0.0
        %722 = vmatpush2.msra.mxu0 0.0
        %723 = vmatprep.subr.mxu0 0.0
        %724 = vmatpush2.msra.mxu0 0.0
        %725 = vmatprep.subr.mxu0 0.0
        %726 = vmatpush2.msra.mxu0 0.0
        %727 = vmatprep.subr.mxu0 0.0
        %728 = vmatpush2.msra.mxu0 0.0
        %729 = vmatprep.subr.mxu0 0.0
        %730 = vmatpush2.msra.mxu0 0.0
        %731 = vmatprep.subr.mxu0 0.0
        %732 = vmatpush2.msra.mxu0 0.0
        %733 = vmatprep.subr.mxu0 0.0
        %734 = vmatpush2.msra.mxu0 0.0
        %735 = vmatprep.subr.mxu0 0.0
        %736 = vmatpush2.msra.mxu0 0.0
        %737 = vmatprep.subr.mxu0 0.0
        %738 = vmatpush2.msra.mxu0 0.0
        %739 = vmatprep.subr.mxu0 0.0
        %740 = vmatpush2.msra.mxu0 0.0
        %741 = vmatprep.subr.mxu0 0.0
        %742 = vmatpush2.msra.mxu0 0.0
        %743 = vmatprep.mubr.f32.mxu0 0.0
        %744 = vmatmul.mubr.f32.gmra.mxu0 %v671
        %v745 = vpop.f32.mrf.mxu0
        %v746 = vadd.f32 %v668, %v745
        %v747 = vpop.f32.mrf.mxu0
        %748 = vmatprep.mubr.f32.mxu0 0.0
        %749 = vmatmul.mubr.f32.gmra.mxu0 %v674
        %v750 = vpop.f32.mrf.mxu0
        %v751 = vadd.f32 %v668, %v750
        %v752 = vpop.f32.mrf.mxu0
        %753 = vmatprep.mubr.f32.mxu0 0.0
        %754 = vmatmul.mubr.f32.gmra.mxu0 %v677
        %v755 = vpop.f32.mrf.mxu0
        %v756 = vadd.f32 %v668, %v755
        %v757 = vpop.f32.mrf.mxu0
        %758 = vdwg.mxu0
        %v759 = vxor.u32 %v746, 2147483648
        %v760 = vxor.u32 %v751, 2147483648
        %v761 = vxor.u32 %v756, 2147483648
        %v762 = vmul.f32 %v759, 1.442695
        %v763 = vpow.pop %v762
        %v764 = vmul.f32 %v760, 1.442695
        %v765 = vpow.pop %v764
        %v766 = vmul.f32 %v761, 1.442695
        %v767 = vpow.pop %v766
        %v768 = vadd.f32 %v763, 1.0
        %v769 = vadd.f32 %v765, 1.0
        %v770 = vadd.f32 %v767, 1.0
        %v771 = vrcp.pop %v768
        %v772 = vmul.f32 1.0, %v771
        %v773 = vrcp.pop %v769
        %v774 = vmul.f32 1.0, %v773
        %v775 = vrcp.pop %v770
        %v776 = vmul.f32 1.0, %v775
        %777 = vst [vmem:[%s326] sm:$0xff] %v772
        %778 = vst [vmem:[%s326 + $0x8] sm:$0xff] %v774
        %779 = vst [vmem:[%s326 + $0x10] sm:$0xff] %v776
        %s780 = sand.u32 %s225, 1
        %s781 = scalar_lea.sflag [#allocation3], %s780
        %s782 = sand.u32 %s225, 1
        %s783 = smul.addr %s782, 24
        %s784 = scalar_lea.vmem [#allocation2], %s783
        // Predicated region
        $region57: #{tpu_custom_call.1} parent=55 // pred_check
          %p785 = pneg %p235
        $region58: #{tpu_custom_call.1} parent=55 // pred_check_branch
          %787 = sbr.rel (%p785) target = $region60
        $region59: #{tpu_custom_call.1} parent=55 // pred_region
          %s788 = smul.u32 3, %s23
          %s790 = ssub.s32 384, 384
          %791 = vsyncadd %s781, %s790
          %s792 = smul.addr %s788, 128
          %s793 = scalar_lea.hbm %s9, %s792
          %s794 = sshll.u32 %s784, 4
          %s795 = int_to_ptr.vmem [resolvable:$true] %s794
          %800 = dma.vmem_to_hbm [thread:$0]  %s795, 384, %s793, %s781, 128, 128, 8
        $region60: #{tpu_custom_call.1} parent=55 // pred_fallthru
          _
      $region56: #{tpu_custom_call.1} parent=5 // pred_fallthru
        _
      %p801 = scmp.le.s32.totalorder 2, %s18
      // Predicated region
      $region61: #{tpu_custom_call.1} parent=5 // pred_check
        %p802 = pneg %p801
      $region62: #{tpu_custom_call.1} parent=5 // pred_check_branch
        %804 = sbr.rel (%p802) target = $region64
      $region63: #{tpu_custom_call.1} parent=5 // pred_region
        %s805 = ssub.s32 %s18, 2
        // Predicated region
        $region65: #{tpu_custom_call.1} parent=63 // pred_check
          %p806 = pneg %p241
        $region66: #{tpu_custom_call.1} parent=63 // pred_check_branch
          %808 = sbr.rel (%p806) target = $region68
        $region67: #{tpu_custom_call.1} parent=63 // pred_region
          %s809 = sand.u32 %s226, 1
          %s810 = scalar_lea.sflag [#allocation3], %s809
          %s811 = sand.u32 %s226, 1
          %s812 = smul.addr %s811, 24
          %s813 = scalar_lea.vmem [#allocation2], %s812
          %814 = dma.done %s810, 384
        $region68: #{tpu_custom_call.1} parent=63 // pred_fallthru
          _
      $region64: #{tpu_custom_call.1} parent=5 // pred_fallthru
        _
    $region6: #{tpu_custom_call.1} parent=1 // loop_footer
      %s22 = sadd.s32 1, %s18
    $region7: #{tpu_custom_call.1} parent=1 // loop_footer_branch
      %17 = sbr.rel target = $region3
    $region8: #{tpu_custom_call.1} parent=1 // loop_exit
      _
    %815 = vsyncpa [#allocation3], 1
    %s816 = scalar_lea.sflag [#allocation3], 1
    %817 = vsyncpa %s816, 1

</llo_original>
